<compile_context>
chip_gen: v7x
topology: tpu7x:2x2x1
jax: 0.10.0
libtpu: 0.0.40
codegen_flags: <defaults>
</compile_context>

<pallas_src>
import functools

import jax
import jax.numpy as jnp
from jax.experimental import pallas as pl
from jax.experimental.pallas import tpu as pltpu

INPUT_DIM = 512
HIDDEN_DIM = 256
EMBED_DIM = 128

# Rows per grid step (cap). 1024x512 f32 x-tile = 2 MiB (x2 bufs) + 0.5 MiB out (x2)
# + <1 MiB resident weights: ~6 MiB, comfortably inside every generation's VMEM.
DEFAULT_BLOCK_B = 1024

# Only split the batch across TensorCores when each core gets at least this many rows.
MIN_ROWS_PER_CORE_SPLIT = 256


def _round_up(n, m):
    return ((n + m - 1) // m) * m


def _sublane_rows(dtype):
    """Native sublane multiple for a dtype: 8 (f32), 16 (bf16), 32 (8-bit)."""
    return max(8, 32 // jnp.dtype(dtype).itemsize)


@functools.lru_cache(maxsize=None)
def _tensorcores_per_device():
    """Best-effort TensorCore count per device (v7x has 2). Defaults to 1."""
    try:
        info = pltpu.get_tpu_info()
        for name in ("num_cores", "core_count", "tensorcores_per_chip", "num_tensorcores"):
            v = getattr(info, name, None)
            if isinstance(v, int) and v >= 1:
                return v
    except Exception:
        pass
    try:
        v = getattr(jax.devices()[0], "num_cores", None)
        if isinstance(v, int) and v >= 1:
            return v
    except Exception:
        pass
    return 1


def _replicated_spec(shape):
    """BlockSpec for a grid-invariant operand (weights / biases).

    Constant index_map => fetched once; Buffered(1) drops the redundant second
    pipeline buffer to save VMEM. Falls back gracefully if pipeline_mode is
    unavailable in the installed JAX.
    """
    try:
        return pl.BlockSpec(shape, lambda i: (0, 0), pipeline_mode=pl.Buffered(1))
    except TypeError:
        return pl.BlockSpec(shape, lambda i: (0, 0))


def _mlp_kernel(x_ref, w1_ref, b1_ref, w2_ref, b2_ref, o_ref):
    # Cast x to the (possibly bf16) weight dtype right before the MXU op; no-op for f32.
    x = x_ref[...].astype(w1_ref.dtype)
    # Layer 1: MXU matmul with f32 accumulation, bias add + ReLU in f32 on the VPU.
    h = jnp.dot(x, w1_ref[...], preferred_element_type=jnp.float32)
    h = jnp.maximum(h + b1_ref[...], 0.0)
    # Layer 2: cast activations to the weight dtype for the MXU, accumulate in f32.
    y = jnp.dot(h.astype(w2_ref.dtype), w2_ref[...],
                preferred_element_type=jnp.float32) + b2_ref[...]
    o_ref[...] = y.astype(o_ref.dtype)


@functools.partial(jax.jit, static_argnames=("block_b",))
def fine_tuner_forward(x, w1, b1, w2, b2, *, block_b=DEFAULT_BLOCK_B):
    B, D = x.shape
    assert D == INPUT_DIM
    out_dtype = x.dtype

    # Batch tile: as large as possible (capped at block_b), rounded to the dtype's
    # native sublane multiple. Split across TensorCores only on multi-TC parts
    # (v7x) and only when each core gets >= MIN_ROWS_PER_CORE_SPLIT rows; on
    # single-TC parts a batch that fits one tile always runs as grid=(1,).
    sub = _sublane_rows(x.dtype)
    cores = _tensorcores_per_device()
    if cores > 1 and B >= cores * MIN_ROWS_PER_CORE_SPLIT:
        tile = min(block_b, _round_up(pl.cdiv(B, cores), sub))
    else:
        tile = min(block_b, _round_up(max(B, 1), sub))
    grid = (pl.cdiv(B, tile),)

    flops = 2 * B * (INPUT_DIM * HIDDEN_DIM + HIDDEN_DIM * EMBED_DIM)
    bytes_accessed = (
        x.size * x.dtype.itemsize
        + B * EMBED_DIM * jnp.dtype(out_dtype).itemsize
        + w1.size * w1.dtype.itemsize + b1.size * b1.dtype.itemsize
        + w2.size * w2.dtype.itemsize + b2.size * b2.dtype.itemsize
    )

    # No pad / slice: out_shape is exactly (B, EMBED_DIM); Pallas masks the
    # partial last block's output store (input garbage rows are row-local).
    out = pl.pallas_call(
        _mlp_kernel,
        out_shape=jax.ShapeDtypeStruct((B, EMBED_DIM), out_dtype),
        grid_spec=pltpu.PrefetchScalarGridSpec(
            num_scalar_prefetch=0,
            grid=grid,
            in_specs=[
                pl.BlockSpec((tile, INPUT_DIM), lambda i: (i, 0)),     # x tile
                _replicated_spec((INPUT_DIM, HIDDEN_DIM)),              # W1 (whole)
                _replicated_spec((1, HIDDEN_DIM)),                      # b1
                _replicated_spec((HIDDEN_DIM, EMBED_DIM)),              # W2 (whole)
                _replicated_spec((1, EMBED_DIM)),                       # b2
            ],
            out_specs=pl.BlockSpec((tile, EMBED_DIM), lambda i: (i, 0)),
        ),
        compiler_params=pltpu.CompilerParams(
            dimension_semantics=("parallel",),
            vmem_limit_bytes=32 * 1024 * 1024,
        ),
        cost_estimate=pl.CostEstimate(
            flops=flops, transcendentals=0, bytes_accessed=bytes_accessed),
    )(x, w1, b1, w2, b2)

    return out


def prepare_params(w1, b1, w2, b2, compute_dtype=jnp.bfloat16):
    """One-time (outside the per-call jit path) cast of the MXU weight operands.

    Default bf16 operands for inference; biases stay f32 (elementwise math is f32).
    Pass compute_dtype=None to keep full f32 weights.
    """
    if compute_dtype is not None:
        w1 = w1.astype(compute_dtype)
        w2 = w2.astype(compute_dtype)
    return w1, b1.astype(jnp.float32), w2, b2.astype(jnp.float32)


def init_params(key):
    """Deterministic init mimicking PyTorch nn.Linear default (uniform +/- 1/sqrt(fan_in))."""
    k1, k2, k3, k4 = jax.random.split(key, 4)
    bound1 = 1.0 / jnp.sqrt(INPUT_DIM)
    bound2 = 1.0 / jnp.sqrt(HIDDEN_DIM)
    w1 = jax.random.uniform(k1, (INPUT_DIM, HIDDEN_DIM), jnp.float32, -bound1, bound1)
    b1 = jax.random.uniform(k2, (1, HIDDEN_DIM), jnp.float32, -bound1, bound1)
    w2 = jax.random.uniform(k3, (HIDDEN_DIM, EMBED_DIM), jnp.float32, -bound2, bound2)
    b2 = jax.random.uniform(k4, (1, EMBED_DIM), jnp.float32, -bound2, bound2)
    return w1, b1, w2, b2


def reference_forward(x, w1, b1, w2, b2):
    h = jnp.maximum(x @ w1 + b1, 0.0)
    return h @ w2 + b2


if __name__ == "__main__":
    key = jax.random.PRNGKey(0)
    kx, kx2, kp = jax.random.split(key, 3)
    w1, b1, w2, b2 = init_params(kp)

    # Full-precision path (exact check): tile = 16, grid = (1,).
    x16 = jax.random.normal(kx, (16, INPUT_DIM), jnp.float32)
    out16 = jax.block_until_ready(fine_tuner_forward(x16, w1, b1, w2, b2))
    ref16 = reference_forward(x16, w1, b1, w2, b2)
    assert out16.shape == (16, EMBED_DIM)
    assert jnp.allclose(out16, ref16, atol=1e-5, rtol=1e-5)

    # Ragged batch (13): exercises the no-pad partial-last-block masked-store path.
    out13 = jax.block_until_ready(fine_tuner_forward(x16[:13], w1, b1, w2, b2))
    assert out13.shape == (13, EMBED_DIM)
    assert jnp.allclose(out13, ref16[:13], atol=1e-5, rtol=1e-5)

    # Default inference path: weights pre-cast once to bf16, f32 accumulation;
    # looser tolerance vs the fp32 reference.
    w1b, b1b, w2b, b2b = prepare_params(w1, b1, w2, b2)  # bf16 operands by default
    x64 = jax.random.normal(kx2, (64, INPUT_DIM), jnp.float32)
    out_bf16 = jax.block_until_ready(fine_tuner_forward(x64, w1b, b1b, w2b, b2b))
    ref64 = reference_forward(x64, w1, b1, w2, b2)
    assert out_bf16.shape == (64, EMBED_DIM)
    assert jnp.allclose(out_bf16, ref64, atol=1e-1, rtol=1e-1)

    # TODO(synk): optional fp8 (float8_e4m3) operand path for v7x left out; same
    # structure would apply with prepare_params(compute_dtype=jnp.float8_e4m3fn).
    print("KERNEL_OK")
</pallas_src>

<mosaic_0001>
module attributes {stable_mosaic.version = 11 : i64} {
  func.func @_mlp_kernel(%arg0: i32, %arg1: memref<16x512xf32, #tpu.memory_space<vmem>>, %arg2: memref<512x256xf32, #tpu.memory_space<vmem>>, %arg3: memref<1x256xf32, #tpu.memory_space<vmem>>, %arg4: memref<256x128xf32, #tpu.memory_space<vmem>>, %arg5: memref<1x128xf32, #tpu.memory_space<vmem>>, %arg6: memref<16x128xf32, #tpu.memory_space<vmem>>) attributes {dimension_semantics = [#tpu.dimension_semantics<parallel>], iteration_bounds = array<i64: 1>, scalar_prefetch = 0 : i64, scratch_operands = 0 : i64, tpu.core_type = #tpu.core_type<tc>, window_params = [{transform_indices = @transform_0, window_bounds = array<i64: 16, 512>}, {pipeline_mode = #tpu.pipeline_mode<synchronous>, transform_indices = @transform_1, window_bounds = array<i64: 512, 256>}, {pipeline_mode = #tpu.pipeline_mode<synchronous>, transform_indices = @transform_2, window_bounds = array<i64: 1, 256>}, {pipeline_mode = #tpu.pipeline_mode<synchronous>, transform_indices = @transform_3, window_bounds = array<i64: 256, 128>}, {pipeline_mode = #tpu.pipeline_mode<synchronous>, transform_indices = @transform_4, window_bounds = array<i64: 1, 128>}, {transform_indices = @transform_5, window_bounds = array<i64: 16, 128>}]} {
    %c0 = arith.constant 0 : index
    %c0_0 = arith.constant 0 : index
    %0 = vector.load %arg1[%c0, %c0_0] : memref<16x512xf32, #tpu.memory_space<vmem>>, vector<16x512xf32>
    %c0_1 = arith.constant 0 : index
    %c0_2 = arith.constant 0 : index
    %1 = vector.load %arg2[%c0_1, %c0_2] : memref<512x256xf32, #tpu.memory_space<vmem>>, vector<512x256xf32>
    %cst = arith.constant dense<0.000000e+00> : vector<16x256xf32>
    %2 = tpu.matmul %0, %1, %cst {dimension_numbers = #tpu.dot_dimension_numbers<[1], [0], [0], [1], [0, 0, 1, 1], [], []>} : vector<16x512xf32>, vector<512x256xf32>, vector<16x256xf32> -> vector<16x256xf32>
    %c0_3 = arith.constant 0 : index
    %c0_4 = arith.constant 0 : index
    %3 = vector.load %arg3[%c0_3, %c0_4] : memref<1x256xf32, #tpu.memory_space<vmem>>, vector<1x256xf32>
    %4 = vector.broadcast %3 : vector<1x256xf32> to vector<16x256xf32>
    %5 = arith.addf %2, %4 : vector<16x256xf32>
    %cst_5 = arith.constant 0.000000e+00 : f32
    %6 = vector.broadcast %cst_5 : f32 to vector<16x256xf32>
    %7 = arith.maximumf %5, %6 : vector<16x256xf32>
    %c0_6 = arith.constant 0 : index
    %c0_7 = arith.constant 0 : index
    %8 = vector.load %arg4[%c0_6, %c0_7] : memref<256x128xf32, #tpu.memory_space<vmem>>, vector<256x128xf32>
    %cst_8 = arith.constant dense<0.000000e+00> : vector<16x128xf32>
    %9 = tpu.matmul %7, %8, %cst_8 {dimension_numbers = #tpu.dot_dimension_numbers<[1], [0], [0], [1], [0, 0, 1, 1], [], []>} : vector<16x256xf32>, vector<256x128xf32>, vector<16x128xf32> -> vector<16x128xf32>
    %c0_9 = arith.constant 0 : index
    %c0_10 = arith.constant 0 : index
    %10 = vector.load %arg5[%c0_9, %c0_10] : memref<1x128xf32, #tpu.memory_space<vmem>>, vector<1x128xf32>
    %11 = vector.broadcast %10 : vector<1x128xf32> to vector<16x128xf32>
    %12 = arith.addf %9, %11 : vector<16x128xf32>
    %c0_11 = arith.constant 0 : index
    %c0_12 = arith.constant 0 : index
    %13 = vector.load %arg6[%c0_11, %c0_12] : memref<16x128xf32, #tpu.memory_space<vmem>>, vector<16x128xf32>
    tpu.vector_store %arg6[%c0_11, %c0_12], %12 {strides = array<i32>} : memref<16x128xf32, #tpu.memory_space<vmem>>, vector<16x128xf32>,
    return
  }
  func.func @transform_0(%arg0: i32) -> (i32, i32) {
    %c0_i32 = arith.constant 0 : i32
    %c0_i32_0 = arith.constant 0 : i32
    return %arg0, %c0_i32 : i32, i32
  }
  func.func @transform_1(%arg0: i32) -> (i32, i32) {
    %c0_i32 = arith.constant 0 : i32
    %c0_i32_0 = arith.constant 0 : i32
    %c0_i32_1 = arith.constant 0 : i32
    return %c0_i32, %c0_i32_0 : i32, i32
  }
  func.func @transform_2(%arg0: i32) -> (i32, i32) {
    %c0_i32 = arith.constant 0 : i32
    %c0_i32_0 = arith.constant 0 : i32
    %c0_i32_1 = arith.constant 0 : i32
    return %c0_i32, %c0_i32_0 : i32, i32
  }
  func.func @transform_3(%arg0: i32) -> (i32, i32) {
    %c0_i32 = arith.constant 0 : i32
    %c0_i32_0 = arith.constant 0 : i32
    %c0_i32_1 = arith.constant 0 : i32
    return %c0_i32, %c0_i32_0 : i32, i32
  }
  func.func @transform_4(%arg0: i32) -> (i32, i32) {
    %c0_i32 = arith.constant 0 : i32
    %c0_i32_0 = arith.constant 0 : i32
    %c0_i32_1 = arith.constant 0 : i32
    return %c0_i32, %c0_i32_0 : i32, i32
  }
  func.func @transform_5(%arg0: i32) -> (i32, i32) {
    %c0_i32 = arith.constant 0 : i32
    %c0_i32_0 = arith.constant 0 : i32
    return %arg0, %c0_i32 : i32, i32
  }
}

</mosaic_0001>

<llo_original>
// kernel: fine_tuner_forward.1
$region0: #{fine_tuner_forward.1}
  #allocation0 [shape = 'u32[]', space=smem, size = 0x4, offset = 0x4, fixed_abs, tag = 'smem constant byte address 0x4 - core index']
  #allocation1 [shape = 'u32[144,128]{1,0:T(1,128)}', space=vmem, size = 0x12000, scoped, tag = 'internal scratch']
  %s0 = inlined_call_operand.hbm [shape: f32[16,512], index: 0, kind: input, shape index: {}]
  %s1 = inlined_call_operand.hbm [shape: f32[512,256], index: 1, kind: input, shape index: {}]
  %s2 = inlined_call_operand.vmem [shape: f32[1,256], index: 2, kind: input, shape index: {}]
  %s3 = inlined_call_operand.hbm [shape: f32[256,128], index: 3, kind: input, shape index: {}]
  %s4 = inlined_call_operand.vmem [shape: f32[1,128], index: 4, kind: input, shape index: {}]
  %s5 = inlined_call_operand.hbm [shape: f32[16,128], index: 5, kind: output, shape index: {}]
  %s6 = sld [smem:[#allocation0]]
  $region42: #{fine_tuner_forward.1} parent=0
    _
  %s8 = ssub.s32 1, %s6
  %s9 = scalar_select 0, %s8, %s6
  $region1: #{fine_tuner_forward.1} parent=0
    #allocation2 [shape = 'u8[32768]{0}', space=vmem, size = 0x8000, scoped, tag = 'input window, operand 0, single buffered']
    #allocation3 [shape = 's32[1]{0}', space=sflag, size = 0x4, scoped, tag = 'scoped memory for fine_tuner_forward.1']
    #allocation4 [shape = 's32[1]{0}', space=sflag, size = 0x4, scoped, tag = 'scoped memory for fine_tuner_forward.1']
    #allocation5 [shape = 'u8[524288]{0}', space=vmem, size = 0x80000, scoped, tag = 'input window, operand 1, single buffered']
    #allocation6 [shape = 's32[1]{0}', space=sflag, size = 0x4, scoped, tag = 'scoped memory for fine_tuner_forward.1']
    #allocation7 [shape = 'u8[131072]{0}', space=vmem, size = 0x20000, scoped, tag = 'input window, operand 3, single buffered']
    #allocation8 [shape = 'u8[8192]{0}', space=vmem, size = 0x2000, scoped, tag = 'output window, operand 0, single buffered']
    %10 = vsyncpa [#allocation3], 0
    %11 = vsyncpa [#allocation6], 0
    %12 = vsyncpa [#allocation4], 0
    // Predicated region
    $region2: #{fine_tuner_forward.1} parent=1 // pred_check
      _
    $region3: #{fine_tuner_forward.1} parent=1 // pred_check_branch
      %14 = sbr.rel (0) target = $region5
    $region4: #{fine_tuner_forward.1} parent=1 // pred_region
      %s16 = ssub.s32 1024, 1024
      %17 = vsyncadd [#allocation3], %s16
      %s18 = sshll.u32 [#allocation2], 4
      %s19 = int_to_ptr.vmem [resolvable:$true] %s18
      %24 = dma.hbm_to_vmem [thread:$0]  %s0, 1024, %s19, [#allocation3], 512, 512, 32
    $region5: #{fine_tuner_forward.1} parent=1 // pred_fallthru
      _
    // Predicated region
    $region6: #{fine_tuner_forward.1} parent=1 // pred_check
      _
    $region7: #{fine_tuner_forward.1} parent=1 // pred_check_branch
      %26 = sbr.rel (0) target = $region9
    $region8: #{fine_tuner_forward.1} parent=1 // pred_region
      %s28 = ssub.s32 16384, 16384
      %29 = vsyncadd [#allocation6], %s28
      %s30 = sshll.u32 [#allocation5], 4
      %s31 = int_to_ptr.vmem [resolvable:$true] %s30
      %36 = dma.hbm_to_vmem [thread:$0]  %s1, 16384, %s31, [#allocation6], 256, 256, 16
    $region9: #{fine_tuner_forward.1} parent=1 // pred_fallthru
      _
    // Predicated region
    $region10: #{fine_tuner_forward.1} parent=1 // pred_check
      _
    $region11: #{fine_tuner_forward.1} parent=1 // pred_check_branch
      %38 = sbr.rel (0) target = $region13
    $region12: #{fine_tuner_forward.1} parent=1 // pred_region
      _
    $region13: #{fine_tuner_forward.1} parent=1 // pred_fallthru
      _
    // Predicated region
    $region14: #{fine_tuner_forward.1} parent=1 // pred_check
      _
    $region15: #{fine_tuner_forward.1} parent=1 // pred_check_branch
      %40 = sbr.rel (0) target = $region17
    $region16: #{fine_tuner_forward.1} parent=1 // pred_region
      %s42 = ssub.s32 4096, 4096
      %43 = vsyncadd [#allocation6], %s42
      %s44 = sshll.u32 [#allocation7], 4
      %s45 = int_to_ptr.vmem [resolvable:$true] %s44
      %50 = dma.hbm_to_vmem [thread:$0]  %s3, 4096, %s45, [#allocation6], 128, 128, 8
    $region17: #{fine_tuner_forward.1} parent=1 // pred_fallthru
      _
    // Predicated region
    $region18: #{fine_tuner_forward.1} parent=1 // pred_check
      _
    $region19: #{fine_tuner_forward.1} parent=1 // pred_check_branch
      %52 = sbr.rel (0) target = $region21
    $region20: #{fine_tuner_forward.1} parent=1 // pred_region
      _
    $region21: #{fine_tuner_forward.1} parent=1 // pred_fallthru
      _
    // Predicated region
    $region22: #{fine_tuner_forward.1} parent=1 // pred_check
      _
    $region23: #{fine_tuner_forward.1} parent=1 // pred_check_branch
      %54 = sbr.rel (0) target = $region25
    $region24: #{fine_tuner_forward.1} parent=1 // pred_region
      %55 = dma.done [#allocation3], 1024
    $region25: #{fine_tuner_forward.1} parent=1 // pred_fallthru
      _
    // Predicated region
    $region26: #{fine_tuner_forward.1} parent=1 // pred_check
      _
    $region27: #{fine_tuner_forward.1} parent=1 // pred_check_branch
      %57 = sbr.rel (0) target = $region29
    $region28: #{fine_tuner_forward.1} parent=1 // pred_region
      %58 = dma.done [#allocation6], 16384
    $region29: #{fine_tuner_forward.1} parent=1 // pred_fallthru
      _
    // Predicated region
    $region30: #{fine_tuner_forward.1} parent=1 // pred_check
      _
    $region31: #{fine_tuner_forward.1} parent=1 // pred_check_branch
      %60 = sbr.rel (0) target = $region33
    $region32: #{fine_tuner_forward.1} parent=1 // pred_region
      %61 = dma.done [#allocation6], 4096
    $region33: #{fine_tuner_forward.1} parent=1 // pred_fallthru
      _
    %v62 = vld [vmem:[#allocation2] sm:$0xff]
    %v63 = vld [vmem:[#allocation2 + $0x8] sm:$0xff]
    %v64 = vld [vmem:[#allocation2 + $0x10] sm:$0xff]
    %v65 = vld [vmem:[#allocation2 + $0x18] sm:$0xff]
    %v66 = vld [vmem:[#allocation2 + $0x20] sm:$0xff]
    %v67 = vld [vmem:[#allocation2 + $0x28] sm:$0xff]
    %v68 = vld [vmem:[#allocation2 + $0x30] sm:$0xff]
    %v69 = vld [vmem:[#allocation2 + $0x38] sm:$0xff]
    %v70 = vld [vmem:[#allocation5] sm:$0xff]
    %v71 = vld [vmem:[#allocation5 + $0x8] sm:$0xff]
    %v72 = vld [vmem:[#allocation5 + $0x10] sm:$0xff]
    %v73 = vld [vmem:[#allocation5 + $0x18] sm:$0xff]
    %v74 = vld [vmem:[#allocation5 + $0x20] sm:$0xff]
    %v75 = vld [vmem:[#allocation5 + $0x28] sm:$0xff]
    %v76 = vld [vmem:[#allocation5 + $0x30] sm:$0xff]
    %v77 = vld [vmem:[#allocation5 + $0x38] sm:$0xff]
    %v78 = vld [vmem:[#allocation5 + $0x40] sm:$0xff]
    %v79 = vld [vmem:[#allocation5 + $0x48] sm:$0xff]
    %v80 = vld [vmem:[#allocation5 + $0x50] sm:$0xff]
    %v81 = vld [vmem:[#allocation5 + $0x58] sm:$0xff]
    %v82 = vld [vmem:[#allocation5 + $0x60] sm:$0xff]
    %v83 = vld [vmem:[#allocation5 + $0x68] sm:$0xff]
    %v84 = vld [vmem:[#allocation5 + $0x70] sm:$0xff]
    %v85 = vld [vmem:[#allocation5 + $0x78] sm:$0xff]
    %v86 = vld [vmem:[#allocation5 + $0x80] sm:$0xff]
    %v87 = vld [vmem:[#allocation5 + $0x88] sm:$0xff]
    %v88 = vld [vmem:[#allocation5 + $0x90] sm:$0xff]
    %v89 = vld [vmem:[#allocation5 + $0x98] sm:$0xff]
    %v90 = vld [vmem:[#allocation5 + $0xa0] sm:$0xff]
    %v91 = vld [vmem:[#allocation5 + $0xa8] sm:$0xff]
    %v92 = vld [vmem:[#allocation5 + $0xb0] sm:$0xff]
    %v93 = vld [vmem:[#allocation5 + $0xb8] sm:$0xff]
    %v94 = vld [vmem:[#allocation5 + $0xc0] sm:$0xff]
    %v95 = vld [vmem:[#allocation5 + $0xc8] sm:$0xff]
    %v96 = vld [vmem:[#allocation5 + $0xd0] sm:$0xff]
    %v97 = vld [vmem:[#allocation5 + $0xd8] sm:$0xff]
    %v98 = vld [vmem:[#allocation5 + $0xe0] sm:$0xff]
    %v99 = vld [vmem:[#allocation5 + $0xe8] sm:$0xff]
    %v100 = vld [vmem:[#allocation5 + $0xf0] sm:$0xff]
    %v101 = vld [vmem:[#allocation5 + $0xf8] sm:$0xff]
    %v102 = vld [vmem:[#allocation5 + $0x100] sm:$0xff]
    %v103 = vld [vmem:[#allocation5 + $0x108] sm:$0xff]
    %v104 = vld [vmem:[#allocation5 + $0x110] sm:$0xff]
    %v105 = vld [vmem:[#allocation5 + $0x118] sm:$0xff]
    %v106 = vld [vmem:[#allocation5 + $0x120] sm:$0xff]
    %v107 = vld [vmem:[#allocation5 + $0x128] sm:$0xff]
    %v108 = vld [vmem:[#allocation5 + $0x130] sm:$0xff]
    %v109 = vld [vmem:[#allocation5 + $0x138] sm:$0xff]
    %v110 = vld [vmem:[#allocation5 + $0x140] sm:$0xff]
    %v111 = vld [vmem:[#allocation5 + $0x148] sm:$0xff]
    %v112 = vld [vmem:[#allocation5 + $0x150] sm:$0xff]
    %v113 = vld [vmem:[#allocation5 + $0x158] sm:$0xff]
    %v114 = vld [vmem:[#allocation5 + $0x160] sm:$0xff]
    %v115 = vld [vmem:[#allocation5 + $0x168] sm:$0xff]
    %v116 = vld [vmem:[#allocation5 + $0x170] sm:$0xff]
    %v117 = vld [vmem:[#allocation5 + $0x178] sm:$0xff]
    %v118 = vld [vmem:[#allocation5 + $0x180] sm:$0xff]
    %v119 = vld [vmem:[#allocation5 + $0x188] sm:$0xff]
    %v120 = vld [vmem:[#allocation5 + $0x190] sm:$0xff]
    %v121 = vld [vmem:[#allocation5 + $0x198] sm:$0xff]
    %v122 = vld [vmem:[#allocation5 + $0x1a0] sm:$0xff]
    %v123 = vld [vmem:[#allocation5 + $0x1a8] sm:$0xff]
    %v124 = vld [vmem:[#allocation5 + $0x1b0] sm:$0xff]
    %v125 = vld [vmem:[#allocation5 + $0x1b8] sm:$0xff]
    %v126 = vld [vmem:[#allocation5 + $0x1c0] sm:$0xff]
    %v127 = vld [vmem:[#allocation5 + $0x1c8] sm:$0xff]
    %v128 = vld [vmem:[#allocation5 + $0x1d0] sm:$0xff]
    %v129 = vld [vmem:[#allocation5 + $0x1d8] sm:$0xff]
    %v130 = vld [vmem:[#allocation5 + $0x1e0] sm:$0xff]
    %v131 = vld [vmem:[#allocation5 + $0x1e8] sm:$0xff]
    %v132 = vld [vmem:[#allocation5 + $0x1f0] sm:$0xff]
    %v133 = vld [vmem:[#allocation5 + $0x1f8] sm:$0xff]
    %v134 = vld [vmem:[#allocation5 + $0x200] sm:$0xff]
    %v135 = vld [vmem:[#allocation5 + $0x208] sm:$0xff]
    %v136 = vld [vmem:[#allocation5 + $0x210] sm:$0xff]
    %v137 = vld [vmem:[#allocation5 + $0x218] sm:$0xff]
    %v138 = vld [vmem:[#allocation5 + $0x220] sm:$0xff]
    %v139 = vld [vmem:[#allocation5 + $0x228] sm:$0xff]
    %v140 = vld [vmem:[#allocation5 + $0x230] sm:$0xff]
    %v141 = vld [vmem:[#allocation5 + $0x238] sm:$0xff]
    %v142 = vld [vmem:[#allocation5 + $0x240] sm:$0xff]
    %v143 = vld [vmem:[#allocation5 + $0x248] sm:$0xff]
    %v144 = vld [vmem:[#allocation5 + $0x250] sm:$0xff]
    %v145 = vld [vmem:[#allocation5 + $0x258] sm:$0xff]
    %v146 = vld [vmem:[#allocation5 + $0x260] sm:$0xff]
    %v147 = vld [vmem:[#allocation5 + $0x268] sm:$0xff]
    %v148 = vld [vmem:[#allocation5 + $0x270] sm:$0xff]
    %v149 = vld [vmem:[#allocation5 + $0x278] sm:$0xff]
    %v150 = vld [vmem:[#allocation5 + $0x280] sm:$0xff]
    %v151 = vld [vmem:[#allocation5 + $0x288] sm:$0xff]
    %v152 = vld [vmem:[#allocation5 + $0x290] sm:$0xff]
    %v153 = vld [vmem:[#allocation5 + $0x298] sm:$0xff]
    %v154 = vld [vmem:[#allocation5 + $0x2a0] sm:$0xff]
    %v155 = vld [vmem:[#allocation5 + $0x2a8] sm:$0xff]
    %v156 = vld [vmem:[#allocation5 + $0x2b0] sm:$0xff]
    %v157 = vld [vmem:[#allocation5 + $0x2b8] sm:$0xff]
    %v158 = vld [vmem:[#allocation5 + $0x2c0] sm:$0xff]
    %v159 = vld [vmem:[#allocation5 + $0x2c8] sm:$0xff]
    %v160 = vld [vmem:[#allocation5 + $0x2d0] sm:$0xff]
    %v161 = vld [vmem:[#allocation5 + $0x2d8] sm:$0xff]
    %v162 = vld [vmem:[#allocation5 + $0x2e0] sm:$0xff]
    %v163 = vld [vmem:[#allocation5 + $0x2e8] sm:$0xff]
    %v164 = vld [vmem:[#allocation5 + $0x2f0] sm:$0xff]
    %v165 = vld [vmem:[#allocation5 + $0x2f8] sm:$0xff]
    %v166 = vld [vmem:[#allocation5 + $0x300] sm:$0xff]
    %v167 = vld [vmem:[#allocation5 + $0x308] sm:$0xff]
    %v168 = vld [vmem:[#allocation5 + $0x310] sm:$0xff]
    %v169 = vld [vmem:[#allocation5 + $0x318] sm:$0xff]
    %v170 = vld [vmem:[#allocation5 + $0x320] sm:$0xff]
    %v171 = vld [vmem:[#allocation5 + $0x328] sm:$0xff]
    %v172 = vld [vmem:[#allocation5 + $0x330] sm:$0xff]
    %v173 = vld [vmem:[#allocation5 + $0x338] sm:$0xff]
    %v174 = vld [vmem:[#allocation5 + $0x340] sm:$0xff]
    %v175 = vld [vmem:[#allocation5 + $0x348] sm:$0xff]
    %v176 = vld [vmem:[#allocation5 + $0x350] sm:$0xff]
    %v177 = vld [vmem:[#allocation5 + $0x358] sm:$0xff]
    %v178 = vld [vmem:[#allocation5 + $0x360] sm:$0xff]
    %v179 = vld [vmem:[#allocation5 + $0x368] sm:$0xff]
    %v180 = vld [vmem:[#allocation5 + $0x370] sm:$0xff]
    %v181 = vld [vmem:[#allocation5 + $0x378] sm:$0xff]
    %v182 = vld [vmem:[#allocation5 + $0x380] sm:$0xff]
    %v183 = vld [vmem:[#allocation5 + $0x388] sm:$0xff]
    %v184 = vld [vmem:[#allocation5 + $0x390] sm:$0xff]
    %v185 = vld [vmem:[#allocation5 + $0x398] sm:$0xff]
    %v186 = vld [vmem:[#allocation5 + $0x3a0] sm:$0xff]
    %v187 = vld [vmem:[#allocation5 + $0x3a8] sm:$0xff]
    %v188 = vld [vmem:[#allocation5 + $0x3b0] sm:$0xff]
    %v189 = vld [vmem:[#allocation5 + $0x3b8] sm:$0xff]
    %v190 = vld [vmem:[#allocation5 + $0x3c0] sm:$0xff]
    %v191 = vld [vmem:[#allocation5 + $0x3c8] sm:$0xff]
    %v192 = vld [vmem:[#allocation5 + $0x3d0] sm:$0xff]
    %v193 = vld [vmem:[#allocation5 + $0x3d8] sm:$0xff]
    %v194 = vld [vmem:[#allocation5 + $0x3e0] sm:$0xff]
    %v195 = vld [vmem:[#allocation5 + $0x3e8] sm:$0xff]
    %v196 = vld [vmem:[#allocation5 + $0x3f0] sm:$0xff]
    %v197 = vld [vmem:[#allocation5 + $0x3f8] sm:$0xff]
    %v198 = vld [vmem:[%s2] sm:$0x3]
    %v200 = vlaneseq
    %v201 = vshrl.u32 %v200, 7
    %v202 = vsub.s32 0, %v201
    %v203 = vrot.slane %v198, %v202
    %v204 = vlaneseq
    %v205 = vshrl.u32 %v204, 7
    %v206 = vsub.s32 1, %v205
    %v207 = vrot.slane %v198, %v206
    %210 = vmatprep.subr.mxu0 %v71
    %211 = vmatpush1.msra.mxu0 %v70
    %212 = vmatprep.subr.mxu0 %v73
    %213 = vmatpush1.msra.mxu0 %v72
    %214 = vmatprep.subr.mxu0 %v75
    %215 = vmatpush1.msra.mxu0 %v74
    %216 = vmatprep.subr.mxu0 %v77
    %217 = vmatpush1.msra.mxu0 %v76
    %218 = vmatprep.subr.mxu0 %v79
    %219 = vmatpush1.msra.mxu0 %v78
    %220 = vmatprep.subr.mxu0 %v81
    %221 = vmatpush1.msra.mxu0 %v80
    %222 = vmatprep.subr.mxu0 %v83
    %223 = vmatpush1.msra.mxu0 %v82
    %224 = vmatprep.subr.mxu0 %v85
    %225 = vmatpush1.msra.mxu0 %v84
    %226 = vmatprep.subr.mxu0 %v87
    %227 = vmatpush1.msra.mxu0 %v86
    %228 = vmatprep.subr.mxu0 %v89
    %229 = vmatpush1.msra.mxu0 %v88
    %230 = vmatprep.subr.mxu0 %v91
    %231 = vmatpush1.msra.mxu0 %v90
    %232 = vmatprep.subr.mxu0 %v93
    %233 = vmatpush1.msra.mxu0 %v92
    %234 = vmatprep.subr.mxu0 %v95
    %235 = vmatpush1.msra.mxu0 %v94
    %236 = vmatprep.subr.mxu0 %v97
    %237 = vmatpush1.msra.mxu0 %v96
    %238 = vmatprep.subr.mxu0 %v99
    %239 = vmatpush1.msra.mxu0 %v98
    %240 = vmatprep.subr.mxu0 %v101
    %241 = vmatpush1.msra.mxu0 %v100
    %242 = vmatprep.subr.mxu0 %v103
    %243 = vmatpush1.msra.mxu0 %v102
    %244 = vmatprep.subr.mxu0 %v105
    %245 = vmatpush1.msra.mxu0 %v104
    %246 = vmatprep.subr.mxu0 %v107
    %247 = vmatpush1.msra.mxu0 %v106
    %248 = vmatprep.subr.mxu0 %v109
    %249 = vmatpush1.msra.mxu0 %v108
    %250 = vmatprep.subr.mxu0 %v111
    %251 = vmatpush1.msra.mxu0 %v110
    %252 = vmatprep.subr.mxu0 %v113
    %253 = vmatpush1.msra.mxu0 %v112
    %254 = vmatprep.subr.mxu0 %v115
    %255 = vmatpush1.msra.mxu0 %v114
    %256 = vmatprep.subr.mxu0 %v117
    %257 = vmatpush1.msra.mxu0 %v116
    %258 = vmatprep.subr.mxu0 %v119
    %259 = vmatpush1.msra.mxu0 %v118
    %260 = vmatprep.subr.mxu0 %v121
    %261 = vmatpush1.msra.mxu0 %v120
    %262 = vmatprep.subr.mxu0 %v123
    %263 = vmatpush1.msra.mxu0 %v122
    %264 = vmatprep.subr.mxu0 %v125
    %265 = vmatpush1.msra.mxu0 %v124
    %266 = vmatprep.subr.mxu0 %v127
    %267 = vmatpush1.msra.mxu0 %v126
    %268 = vmatprep.subr.mxu0 %v129
    %269 = vmatpush1.msra.mxu0 %v128
    %270 = vmatprep.subr.mxu0 %v131
    %271 = vmatpush1.msra.mxu0 %v130
    %272 = vmatprep.subr.mxu0 %v133
    %273 = vmatpush1.msra.mxu0 %v132
    %274 = vmatprep.mubr.f32.mxu0 %v63
    %275 = vmatmul.mubr.f32.gmra.mrb[0].mxu0 %v62
    %v276 = vpop.f32.mrb[0].mxu0
    %v277 = vadd.f32 %v203, %v276
    %v278 = vpop.f32.mrb[0].mxu0
    %v279 = vadd.f32 %v207, %v278
    %280 = vmatprep.mubr.f32.mxu0 %v67
    %281 = vmatmul.mubr.f32.gmra.mrb[0].mxu0 %v66
    %v282 = vpop.f32.mrb[0].mxu0
    %v283 = vadd.f32 %v203, %v282
    %v284 = vpop.f32.mrb[0].mxu0
    %v285 = vadd.f32 %v207, %v284
    %286 = vdwg.mxu0
    %287 = vmatprep.subr.mxu0 %v135
    %288 = vmatpush1.msra.mxu0 %v134
    %289 = vmatprep.subr.mxu0 %v137
    %290 = vmatpush1.msra.mxu0 %v136
    %291 = vmatprep.subr.mxu0 %v139
    %292 = vmatpush1.msra.mxu0 %v138
    %293 = vmatprep.subr.mxu0 %v141
    %294 = vmatpush1.msra.mxu0 %v140
    %295 = vmatprep.subr.mxu0 %v143
    %296 = vmatpush1.msra.mxu0 %v142
    %297 = vmatprep.subr.mxu0 %v145
    %298 = vmatpush1.msra.mxu0 %v144
    %299 = vmatprep.subr.mxu0 %v147
    %300 = vmatpush1.msra.mxu0 %v146
    %301 = vmatprep.subr.mxu0 %v149
    %302 = vmatpush1.msra.mxu0 %v148
    %303 = vmatprep.subr.mxu0 %v151
    %304 = vmatpush1.msra.mxu0 %v150
    %305 = vmatprep.subr.mxu0 %v153
    %306 = vmatpush1.msra.mxu0 %v152
    %307 = vmatprep.subr.mxu0 %v155
    %308 = vmatpush1.msra.mxu0 %v154
    %309 = vmatprep.subr.mxu0 %v157
    %310 = vmatpush1.msra.mxu0 %v156
    %311 = vmatprep.subr.mxu0 %v159
    %312 = vmatpush1.msra.mxu0 %v158
    %313 = vmatprep.subr.mxu0 %v161
    %314 = vmatpush1.msra.mxu0 %v160
    %315 = vmatprep.subr.mxu0 %v163
    %316 = vmatpush1.msra.mxu0 %v162
    %317 = vmatprep.subr.mxu0 %v165
    %318 = vmatpush1.msra.mxu0 %v164
    %319 = vmatprep.subr.mxu0 %v167
    %320 = vmatpush1.msra.mxu0 %v166
    %321 = vmatprep.subr.mxu0 %v169
    %322 = vmatpush1.msra.mxu0 %v168
    %323 = vmatprep.subr.mxu0 %v171
    %324 = vmatpush1.msra.mxu0 %v170
    %325 = vmatprep.subr.mxu0 %v173
    %326 = vmatpush1.msra.mxu0 %v172
    %327 = vmatprep.subr.mxu0 %v175
    %328 = vmatpush1.msra.mxu0 %v174
    %329 = vmatprep.subr.mxu0 %v177
    %330 = vmatpush1.msra.mxu0 %v176
    %331 = vmatprep.subr.mxu0 %v179
    %332 = vmatpush1.msra.mxu0 %v178
    %333 = vmatprep.subr.mxu0 %v181
    %334 = vmatpush1.msra.mxu0 %v180
    %335 = vmatprep.subr.mxu0 %v183
    %336 = vmatpush1.msra.mxu0 %v182
    %337 = vmatprep.subr.mxu0 %v185
    %338 = vmatpush1.msra.mxu0 %v184
    %339 = vmatprep.subr.mxu0 %v187
    %340 = vmatpush1.msra.mxu0 %v186
    %341 = vmatprep.subr.mxu0 %v189
    %342 = vmatpush1.msra.mxu0 %v188
    %343 = vmatprep.subr.mxu0 %v191
    %344 = vmatpush1.msra.mxu0 %v190
    %345 = vmatprep.subr.mxu0 %v193
    %346 = vmatpush1.msra.mxu0 %v192
    %347 = vmatprep.subr.mxu0 %v195
    %348 = vmatpush1.msra.mxu0 %v194
    %349 = vmatprep.subr.mxu0 %v197
    %350 = vmatpush1.msra.mxu0 %v196
    %351 = vmatprep.mubr.f32.mxu0 %v65
    %352 = vmatmul.mubr.f32.gmra.mrb[0].mxu0 %v64
    %v353 = vpop.f32.mrb[0].mxu0
    %v354 = vadd.f32 %v277, %v353
    %v355 = vpop.f32.mrb[0].mxu0
    %v356 = vadd.f32 %v279, %v355
    %357 = vmatprep.mubr.f32.mxu0 %v69
    %358 = vmatmul.mubr.f32.gmra.mrb[0].mxu0 %v68
    %v359 = vpop.f32.mrb[0].mxu0
    %v360 = vadd.f32 %v283, %v359
    %v361 = vpop.f32.mrb[0].mxu0
    %v362 = vadd.f32 %v285, %v361
    %363 = vdwg.mxu0
    %v364 = vmax.f32 %v354, 0.0
    %v365 = vmax.f32 %v356, 0.0
    %v366 = vmax.f32 %v360, 0.0
    %v367 = vmax.f32 %v362, 0.0
    %v368 = vld [vmem:[#allocation7] sm:$0xff]
    %v369 = vld [vmem:[#allocation7 + $0x8] sm:$0xff]
    %v370 = vld [vmem:[#allocation7 + $0x10] sm:$0xff]
    %v371 = vld [vmem:[#allocation7 + $0x18] sm:$0xff]
    %v372 = vld [vmem:[#allocation7 + $0x20] sm:$0xff]
    %v373 = vld [vmem:[#allocation7 + $0x28] sm:$0xff]
    %v374 = vld [vmem:[#allocation7 + $0x30] sm:$0xff]
    %v375 = vld [vmem:[#allocation7 + $0x38] sm:$0xff]
    %v376 = vld [vmem:[#allocation7 + $0x40] sm:$0xff]
    %v377 = vld [vmem:[#allocation7 + $0x48] sm:$0xff]
    %v378 = vld [vmem:[#allocation7 + $0x50] sm:$0xff]
    %v379 = vld [vmem:[#allocation7 + $0x58] sm:$0xff]
    %v380 = vld [vmem:[#allocation7 + $0x60] sm:$0xff]
    %v381 = vld [vmem:[#allocation7 + $0x68] sm:$0xff]
    %v382 = vld [vmem:[#allocation7 + $0x70] sm:$0xff]
    %v383 = vld [vmem:[#allocation7 + $0x78] sm:$0xff]
    %v384 = vld [vmem:[#allocation7 + $0x80] sm:$0xff]
    %v385 = vld [vmem:[#allocation7 + $0x88] sm:$0xff]
    %v386 = vld [vmem:[#allocation7 + $0x90] sm:$0xff]
    %v387 = vld [vmem:[#allocation7 + $0x98] sm:$0xff]
    %v388 = vld [vmem:[#allocation7 + $0xa0] sm:$0xff]
    %v389 = vld [vmem:[#allocation7 + $0xa8] sm:$0xff]
    %v390 = vld [vmem:[#allocation7 + $0xb0] sm:$0xff]
    %v391 = vld [vmem:[#allocation7 + $0xb8] sm:$0xff]
    %v392 = vld [vmem:[#allocation7 + $0xc0] sm:$0xff]
    %v393 = vld [vmem:[#allocation7 + $0xc8] sm:$0xff]
    %v394 = vld [vmem:[#allocation7 + $0xd0] sm:$0xff]
    %v395 = vld [vmem:[#allocation7 + $0xd8] sm:$0xff]
    %v396 = vld [vmem:[#allocation7 + $0xe0] sm:$0xff]
    %v397 = vld [vmem:[#allocation7 + $0xe8] sm:$0xff]
    %v398 = vld [vmem:[#allocation7 + $0xf0] sm:$0xff]
    %v399 = vld [vmem:[#allocation7 + $0xf8] sm:$0xff]
    %v400 = vld [vmem:[%s4] sm:$0x1]
    %v402 = vlaneseq
    %v403 = vshrl.u32 %v402, 7
    %v404 = vsub.s32 0, %v403
    %v405 = vrot.slane %v400, %v404
    %407 = vmatprep.subr.mxu0 0.0
    %408 = vmatpush1.msra.mxu0 %v368
    %409 = vmatprep.subr.mxu0 0.0
    %410 = vmatpush1.msra.mxu0 %v369
    %411 = vmatprep.subr.mxu0 0.0
    %412 = vmatpush1.msra.mxu0 %v370
    %413 = vmatprep.subr.mxu0 0.0
    %414 = vmatpush1.msra.mxu0 %v371
    %415 = vmatprep.subr.mxu0 0.0
    %416 = vmatpush1.msra.mxu0 %v372
    %417 = vmatprep.subr.mxu0 0.0
    %418 = vmatpush1.msra.mxu0 %v373
    %419 = vmatprep.subr.mxu0 0.0
    %420 = vmatpush1.msra.mxu0 %v374
    %421 = vmatprep.subr.mxu0 0.0
    %422 = vmatpush1.msra.mxu0 %v375
    %423 = vmatprep.subr.mxu0 0.0
    %424 = vmatpush1.msra.mxu0 %v376
    %425 = vmatprep.subr.mxu0 0.0
    %426 = vmatpush1.msra.mxu0 %v377
    %427 = vmatprep.subr.mxu0 0.0
    %428 = vmatpush1.msra.mxu0 %v378
    %429 = vmatprep.subr.mxu0 0.0
    %430 = vmatpush1.msra.mxu0 %v379
    %431 = vmatprep.subr.mxu0 0.0
    %432 = vmatpush1.msra.mxu0 %v380
    %433 = vmatprep.subr.mxu0 0.0
    %434 = vmatpush1.msra.mxu0 %v381
    %435 = vmatprep.subr.mxu0 0.0
    %436 = vmatpush1.msra.mxu0 %v382
    %437 = vmatprep.subr.mxu0 0.0
    %438 = vmatpush1.msra.mxu0 %v383
    %439 = vmatprep.subr.mxu0 0.0
    %440 = vmatpush1.msra.mxu0 %v384
    %441 = vmatprep.subr.mxu0 0.0
    %442 = vmatpush1.msra.mxu0 %v385
    %443 = vmatprep.subr.mxu0 0.0
    %444 = vmatpush1.msra.mxu0 %v386
    %445 = vmatprep.subr.mxu0 0.0
    %446 = vmatpush1.msra.mxu0 %v387
    %447 = vmatprep.subr.mxu0 0.0
    %448 = vmatpush1.msra.mxu0 %v388
    %449 = vmatprep.subr.mxu0 0.0
    %450 = vmatpush1.msra.mxu0 %v389
    %451 = vmatprep.subr.mxu0 0.0
    %452 = vmatpush1.msra.mxu0 %v390
    %453 = vmatprep.subr.mxu0 0.0
    %454 = vmatpush1.msra.mxu0 %v391
    %455 = vmatprep.subr.mxu0 0.0
    %456 = vmatpush1.msra.mxu0 %v392
    %457 = vmatprep.subr.mxu0 0.0
    %458 = vmatpush1.msra.mxu0 %v393
    %459 = vmatprep.subr.mxu0 0.0
    %460 = vmatpush1.msra.mxu0 %v394
    %461 = vmatprep.subr.mxu0 0.0
    %462 = vmatpush1.msra.mxu0 %v395
    %463 = vmatprep.subr.mxu0 0.0
    %464 = vmatpush1.msra.mxu0 %v396
    %465 = vmatprep.subr.mxu0 0.0
    %466 = vmatpush1.msra.mxu0 %v397
    %467 = vmatprep.subr.mxu0 0.0
    %468 = vmatpush1.msra.mxu0 %v398
    %469 = vmatprep.subr.mxu0 0.0
    %470 = vmatpush1.msra.mxu0 %v399
    %471 = vmatprep.mubr.f32.mxu0 %v365
    %472 = vmatmul.mubr.f32.gmra.mrb[0].mxu0 %v364
    %v473 = vpop.f32.mrb[0].mxu0
    %v474 = vadd.f32 %v405, %v473
    %v475 = vpop.f32.mrb[0].mxu0
    %476 = vmatprep.mubr.f32.mxu0 %v367
    %477 = vmatmul.mubr.f32.gmra.mrb[0].mxu0 %v366
    %v478 = vpop.f32.mrb[0].mxu0
    %v479 = vadd.f32 %v405, %v478
    %v480 = vpop.f32.mrb[0].mxu0
    %481 = vdwg.mxu0
    %482 = vst [vmem:[#allocation8] sm:$0xff] %v474
    %483 = vst [vmem:[#allocation8 + $0x8] sm:$0xff] %v479
    // Predicated region
    $region34: #{fine_tuner_forward.1} parent=1 // pred_check
      _
    $region35: #{fine_tuner_forward.1} parent=1 // pred_check_branch
      %485 = sbr.rel (0) target = $region37
    $region36: #{fine_tuner_forward.1} parent=1 // pred_region
      %s487 = ssub.s32 256, 256
      %488 = vsyncadd [#allocation4], %s487
      %s489 = sshll.u32 [#allocation8], 4
      %s490 = int_to_ptr.vmem [resolvable:$true] %s489
      %495 = dma.vmem_to_hbm [thread:$0]  %s490, 256, %s5, [#allocation4], 128, 128, 8
    $region37: #{fine_tuner_forward.1} parent=1 // pred_fallthru
      _
    // Predicated region
    $region38: #{fine_tuner_forward.1} parent=1 // pred_check
      _
    $region39: #{fine_tuner_forward.1} parent=1 // pred_check_branch
      %497 = sbr.rel (0) target = $region41
    $region40: #{fine_tuner_forward.1} parent=1 // pred_region
      %498 = dma.done [#allocation4], 256
    $region41: #{fine_tuner_forward.1} parent=1 // pred_fallthru
      _
    %499 = vsyncpa [#allocation3], 1
    %500 = vsyncpa [#allocation6], 1
    %501 = vsyncpa [#allocation4], 1

</llo_original>
